<compile_context>
chip_gen: v7x
topology: tpu7x:2x2x1
jax: 0.10.0
libtpu: 0.0.40
codegen_flags: <defaults>
</compile_context>

<pallas_src>
import jax
import jax.numpy as jnp
import numpy as np
from jax.experimental import pallas as pl
from jax.experimental.pallas import tpu as pltpu


_DEFAULT_VMEM_LIMIT = 64 * 1024 * 1024  # raise above 32 MiB scoped default


# ----------------------------------------------------------------------------
# Pallas kernels
# ----------------------------------------------------------------------------

def _make_pointwise_kernel(apply_relu):
    """1x1x1 conv (as a matmul) + shift + optional ReLU."""
    def kernel(x_ref, w_ref, shift_ref, o_ref):
        # x_ref: (tm, Cin); w_ref: (Cin, Cout) with BN scale pre-folded;
        # shift_ref: (1, Cout); o_ref: (tm, Cout)
        y = jnp.dot(x_ref[...], w_ref[...], preferred_element_type=jnp.float32)
        y = y + shift_ref[...]
        if apply_relu:
            y = jnp.maximum(y, 0.0)
        o_ref[...] = y.astype(o_ref.dtype)
    return kernel


def _make_spatial_kernel(kD, kH, kW, Td, Hout, Wout, apply_relu):
    """kD x kH x kW conv (stride 1, padding k//2) + shift + optional ReLU.

    Per grid step: one Td-plane main view + (kD-1) single-plane halo views of
    the padded volume form a (Td + kD - 1)-plane slab.  For each kd tap we do
    one im2col (K = kH*kW*Cin) and one MXU matmul, accumulating into an f32
    VMEM scratch; shift/ReLU once in the epilogue.
    """
    def kernel(*refs):
        main_ref = refs[0]                       # (1, Td, Hp, Wp, Cin)
        halo_refs = refs[1:kD]                   # (kD-1) x (1, 1, Hp, Wp, Cin)
        w_ref, shift_ref, o_ref, acc_ref = refs[kD:kD + 4]
        Cout = o_ref.shape[-1]
        Cin = main_ref.shape[-1]

        parts = [main_ref[0]] + [h[0] for h in halo_refs]
        slab = jnp.concatenate(parts, axis=0) if len(parts) > 1 else parts[0]
        # slab: (Td + kD - 1, Hp, Wp, Cin)

        for kd in range(kD):
            planes = slab[kd:kd + Td]            # (Td, Hp, Wp, Cin)
            # Fuse ALL kH*kW taps into a single contraction (K = kH*kW*Cin).
            patch = jnp.concatenate(
                [planes[:, kh:kh + Hout, kw:kw + Wout, :]
                 for kh in range(kH) for kw in range(kW)],
                axis=-1)                          # (Td, Hout, Wout, kH*kW*Cin)
            contrib = jnp.dot(
                patch.reshape(Td * Hout * Wout, kH * kW * Cin),
                w_ref[kd], preferred_element_type=jnp.float32)
            if kd == 0:
                acc_ref[...] = contrib
            else:
                acc_ref[...] += contrib

        y = acc_ref[...] + shift_ref[...]
        if apply_relu:
            y = jnp.maximum(y, 0.0)
        o_ref[...] = y.astype(o_ref.dtype).reshape(1, Td, Hout, Wout, Cout)
    return kernel


# ----------------------------------------------------------------------------
# pallas_call wrappers
# ----------------------------------------------------------------------------

def _pointwise_conv_bn_act(x, w_folded, shift, apply_relu, out_dtype,
                           tm=1024, vmem_limit_bytes=_DEFAULT_VMEM_LIMIT):
    """x: (N, D, H, W, Cin); w_folded: (Cin, Cout); shift: (1, Cout)."""
    N, D, H, W, Cin = x.shape
    Cout = w_folded.shape[1]
    M = N * D * H * W
    x2d = x.reshape(M, Cin)   # contiguous NDHWC -> (M, Cin): free reshape

    # Fixed row tile (multiple of 8).  NO host padding: ragged last block is
    # handled by Pallas (masked store), so no extra HBM read/write of x.
    tm = min(tm, max(8, ((M + 7) // 8) * 8))
    grid = (pl.cdiv(M, tm),)

    out = pl.pallas_call(
        _make_pointwise_kernel(apply_relu),
        out_shape=jax.ShapeDtypeStruct((M, Cout), out_dtype),
        grid_spec=pltpu.PrefetchScalarGridSpec(
            num_scalar_prefetch=0,
            grid=grid,
            in_specs=[
                pl.BlockSpec((tm, Cin), lambda i: (i, 0)),
                pl.BlockSpec((Cin, Cout), lambda i: (0, 0)),
                pl.BlockSpec((1, Cout), lambda i: (0, 0)),
            ],
            out_specs=pl.BlockSpec((tm, Cout), lambda i: (i, 0)),
        ),
        compiler_params=pltpu.CompilerParams(
            dimension_semantics=("parallel",),
            vmem_limit_bytes=vmem_limit_bytes),
    )(x2d, w_folded, shift)
    return out.reshape(N, D, H, W, Cout)


def _spatial_conv_bn_act(x, w_folded, shift, ksize, apply_relu, out_dtype,
                         block_d=4, vmem_limit_bytes=_DEFAULT_VMEM_LIMIT):
    """x: (N, D, H, W, Cin); w_folded: (kD, kH*kW*Cin, Cout); stride 1."""
    N, D, H, W, Cin = x.shape
    kD, kH, kW = ksize
    Cout = w_folded.shape[-1]
    pd, ph, pw = kD // 2, kH // 2, kW // 2
    Dout = D + 2 * pd - kD + 1
    Hout = H + 2 * ph - kH + 1
    Wout = W + 2 * pw - kW + 1

    Td = max(1, min(block_d, Dout))
    num_db = pl.cdiv(Dout, Td)

    # One padded copy in HBM.  Trailing D pad ensures every plane index touched
    # by the halo views exists (num_db*Td + kD - 1 padded planes total).
    d_total = num_db * Td + kD - 1
    d_trail = d_total - D - pd
    xp = jnp.pad(x, ((0, 0), (pd, d_trail), (ph, ph), (pw, pw), (0, 0)))
    _, Dp, Hp, Wp, _ = xp.shape

    # Main view: Td padded planes per step (block index db along the Td-blocked
    # D axis).  Halo views: single planes db*Td + Td + j (element == block
    # index because the block size along D is 1).  Default-arg capture avoids
    # the late-binding closure bug.
    main_spec = pl.BlockSpec((1, Td, Hp, Wp, Cin),
                             lambda n, db: (n, db, 0, 0, 0))
    halo_specs = [
        pl.BlockSpec((1, 1, Hp, Wp, Cin),
                     lambda n, db, j=j, Td=Td: (n, db * Td + Td + j, 0, 0, 0))
        for j in range(kD - 1)
    ]

    return pl.pallas_call(
        _make_spatial_kernel(kD, kH, kW, Td, Hout, Wout, apply_relu),
        out_shape=jax.ShapeDtypeStruct((N, Dout, Hout, Wout, Cout), out_dtype),
        grid_spec=pltpu.PrefetchScalarGridSpec(
            num_scalar_prefetch=0,
            grid=(N, num_db),
            in_specs=[main_spec] + halo_specs + [
                pl.BlockSpec((kD, kH * kW * Cin, Cout),
                             lambda n, db: (0, 0, 0)),
                pl.BlockSpec((1, Cout), lambda n, db: (0, 0)),
            ],
            out_specs=pl.BlockSpec((1, Td, Hout, Wout, Cout),
                                   lambda n, db: (n, db, 0, 0, 0)),
            scratch_shapes=[pltpu.VMEM((Td * Hout * Wout, Cout), jnp.float32)],
        ),
        compiler_params=pltpu.CompilerParams(
            dimension_semantics=("parallel", "parallel"),
            vmem_limit_bytes=vmem_limit_bytes),
    )(*([xp] * kD), w_folded, shift)


# ----------------------------------------------------------------------------
# Unit3D forward (fused Conv3d + BN(inference) + ReLU)
# ----------------------------------------------------------------------------

def unit3d_forward(x, params, kernel_size=(1, 1, 1), stride=(1, 1, 1),
                   apply_relu=True, compute_dtype=None, data_format="NCDHW",
                   block_d=4, vmem_limit_bytes=_DEFAULT_VMEM_LIMIT):
    """PyTorch-equivalent Unit3D forward.

    x      : (N, Cin, D, H, W) if data_format == "NCDHW" (PyTorch layout),
             or (N, D, H, W, Cin) if data_format == "NDHWC" (recommended when
             chaining Unit3D layers: avoids two HBM transpose passes per call).
    params : {"w": (Cout, Cin, kD, kH, kW) torch OIDHW conv weight,
              "scale": (Cout,) folded BN scale, "shift": (Cout,) folded shift}
    compute_dtype: e.g. jnp.bfloat16 on v6e/v7x (accumulation stays f32).
    """
    if data_format == "NCDHW":
        xl = jnp.transpose(x, (0, 2, 3, 4, 1))       # NCDHW -> NDHWC
    elif data_format == "NDHWC":
        xl = x
    else:
        raise ValueError(f"bad data_format: {data_format}")

    w, scale, shift = params["w"], params["scale"], params["shift"]
    Cout, Cin = w.shape[0], w.shape[1]
    shift2d = shift.reshape(1, Cout).astype(jnp.float32)
    cdt = compute_dtype if compute_dtype is not None else xl.dtype
    out_dtype = xl.dtype

    if tuple(kernel_size) == (1, 1, 1):
        if tuple(stride) != (1, 1, 1):
            # padding = k//2 = 0, so a strided 1x1x1 conv is a pure subsample.
            xl = xl[:, ::stride[0], ::stride[1], ::stride[2], :]
        wf = (jnp.transpose(w[:, :, 0, 0, 0], (1, 0))
              * scale[None, :]).astype(cdt)           # (Cin, Cout), BN folded
        y = _pointwise_conv_bn_act(xl.astype(cdt), wf, shift2d, apply_relu,
                                   out_dtype, vmem_limit_bytes=vmem_limit_bytes)
    else:
        if tuple(stride) != (1, 1, 1):
            # TODO(synk): strided spatial Unit3D conv not implemented in Pallas.
            raise NotImplementedError("spatial Unit3D with stride != (1,1,1)")
        kD, kH, kW = kernel_size
        wt = jnp.transpose(w, (2, 3, 4, 1, 0))        # (kD,kH,kW,Cin,Cout)
        wt = wt * scale[None, None, None, None, :]    # fold BN scale
        wf = wt.reshape(kD, kH * kW * Cin, Cout).astype(cdt)
        y = _spatial_conv_bn_act(xl.astype(cdt), wf, shift2d, kernel_size,
                                 apply_relu, out_dtype, block_d=block_d,
                                 vmem_limit_bytes=vmem_limit_bytes)

    if data_format == "NCDHW":
        y = jnp.transpose(y, (0, 4, 1, 2, 3))         # NDHWC -> NCDHW
    return y


# ----------------------------------------------------------------------------
# Deterministic parameter init (Conv3d no-bias + BN running stats folded)
# ----------------------------------------------------------------------------

def init_unit3d_params(key, cin, cout, ksize):
    k1, k2, k3, k4, k5 = jax.random.split(key, 5)
    w = 0.1 * jax.random.normal(k1, (cout, cin) + tuple(ksize), jnp.float32)
    gamma = 1.0 + 0.1 * jax.random.normal(k2, (cout,), jnp.float32)
    beta = 0.1 * jax.random.normal(k3, (cout,), jnp.float32)
    mean = 0.1 * jax.random.normal(k4, (cout,), jnp.float32)
    var = jax.random.uniform(k5, (cout,), jnp.float32, minval=0.5, maxval=1.5)
    eps = 1e-3                                  # matches nn.BatchNorm3d(eps=0.001)
    scale = gamma / jnp.sqrt(var + eps)
    shift = beta - mean * scale
    return {"w": w, "scale": scale, "shift": shift}


# ----------------------------------------------------------------------------
# Pure-JAX reference (for verification)
# ----------------------------------------------------------------------------

def ref_unit3d(x, p, ksize, apply_relu=True):
    pad = [(k // 2, k // 2) for k in ksize]
    y = jax.lax.conv_general_dilated(
        x, p["w"], window_strides=(1, 1, 1), padding=pad,
        dimension_numbers=("NCDHW", "OIDHW", "NCDHW"))
    y = y * p["scale"].reshape(1, -1, 1, 1, 1) + p["shift"].reshape(1, -1, 1, 1, 1)
    return jnp.maximum(y, 0.0) if apply_relu else y


# ----------------------------------------------------------------------------

if __name__ == "__main__":
    key = jax.random.PRNGKey(0)
    kx, k1, k2 = jax.random.split(key, 3)

    N, Cin, D, H, W = 2, 4, 4, 8, 8
    x = jax.random.normal(kx, (N, Cin, D, H, W), jnp.float32)   # PyTorch NCDHW

    # Two Unit3D configurations typical of I3D: a pointwise and a 3x3x3 unit.
    p1 = init_unit3d_params(k1, Cin, 16, (1, 1, 1))
    p2 = init_unit3d_params(k2, Cin, 8, (3, 3, 3))

    fwd_1x1 = jax.jit(lambda xx, pp: unit3d_forward(xx, pp, (1, 1, 1)))
    fwd_3x3 = jax.jit(lambda xx, pp: unit3d_forward(xx, pp, (3, 3, 3)))
    fwd_3x3_bf16 = jax.jit(lambda xx, pp: unit3d_forward(
        xx, pp, (3, 3, 3), compute_dtype=jnp.bfloat16))

    y1 = jax.block_until_ready(fwd_1x1(x, p1))
    y2 = jax.block_until_ready(fwd_3x3(x, p2))
    y2b = jax.block_until_ready(fwd_3x3_bf16(x, p2))

    assert y1.shape == (N, 16, D, H, W), y1.shape
    assert y2.shape == (N, 8, D, H, W), y2.shape
    assert y2b.shape == (N, 8, D, H, W), y2b.shape

    r1 = ref_unit3d(x, p1, (1, 1, 1))
    r2 = ref_unit3d(x, p2, (3, 3, 3))
    np.testing.assert_allclose(np.asarray(y1), np.asarray(r1),
                               rtol=2e-3, atol=2e-3)
    np.testing.assert_allclose(np.asarray(y2), np.asarray(r2),
                               rtol=2e-3, atol=2e-3)
    # bf16 compute path (f32 accumulation) -> looser tolerance.
    np.testing.assert_allclose(np.asarray(y2b), np.asarray(r2),
                               rtol=5e-2, atol=5e-2)

    print("KERNEL_OK")
</pallas_src>

<mosaic_0001>
module attributes {stable_mosaic.version = 11 : i64} {
  func.func @kernel(%arg0: i32, %arg1: memref<512x4xf32, #tpu.memory_space<vmem>>, %arg2: memref<4x16xf32, #tpu.memory_space<vmem>>, %arg3: memref<1x16xf32, #tpu.memory_space<vmem>>, %arg4: memref<512x16xf32, #tpu.memory_space<vmem>>) attributes {dimension_semantics = [#tpu.dimension_semantics<parallel>], iteration_bounds = array<i64: 1>, scalar_prefetch = 0 : i64, scratch_operands = 0 : i64, tpu.core_type = #tpu.core_type<tc>, window_params = [{transform_indices = @transform_0, window_bounds = array<i64: 512, 4>}, {pipeline_mode = #tpu.pipeline_mode<synchronous>, transform_indices = @transform_1, window_bounds = array<i64: 4, 16>}, {pipeline_mode = #tpu.pipeline_mode<synchronous>, transform_indices = @transform_2, window_bounds = array<i64: 1, 16>}, {transform_indices = @transform_3, window_bounds = array<i64: 512, 16>}]} {
    %c0 = arith.constant 0 : index
    %c0_0 = arith.constant 0 : index
    %0 = vector.load %arg1[%c0, %c0_0] : memref<512x4xf32, #tpu.memory_space<vmem>>, vector<512x4xf32>
    %c0_1 = arith.constant 0 : index
    %c0_2 = arith.constant 0 : index
    %1 = vector.load %arg2[%c0_1, %c0_2] : memref<4x16xf32, #tpu.memory_space<vmem>>, vector<4x16xf32>
    %cst = arith.constant dense<0.000000e+00> : vector<512x16xf32>
    %2 = tpu.matmul %0, %1, %cst {dimension_numbers = #tpu.dot_dimension_numbers<[1], [0], [0], [1], [0, 0, 1, 1], [], []>} : vector<512x4xf32>, vector<4x16xf32>, vector<512x16xf32> -> vector<512x16xf32>
    %c0_3 = arith.constant 0 : index
    %c0_4 = arith.constant 0 : index
    %3 = vector.load %arg3[%c0_3, %c0_4] : memref<1x16xf32, #tpu.memory_space<vmem>>, vector<1x16xf32>
    %4 = vector.broadcast %3 : vector<1x16xf32> to vector<512x16xf32>
    %5 = arith.addf %2, %4 : vector<512x16xf32>
    %cst_5 = arith.constant 0.000000e+00 : f32
    %6 = vector.broadcast %cst_5 : f32 to vector<512x16xf32>
    %7 = arith.maximumf %5, %6 : vector<512x16xf32>
    %c0_6 = arith.constant 0 : index
    %c0_7 = arith.constant 0 : index
    %8 = vector.load %arg4[%c0_6, %c0_7] : memref<512x16xf32, #tpu.memory_space<vmem>>, vector<512x16xf32>
    tpu.vector_store %arg4[%c0_6, %c0_7], %7 {strides = array<i32>} : memref<512x16xf32, #tpu.memory_space<vmem>>, vector<512x16xf32>,
    return
  }
  func.func @transform_0(%arg0: i32) -> (i32, i32) {
    %c0_i32 = arith.constant 0 : i32
    %c0_i32_0 = arith.constant 0 : i32
    return %arg0, %c0_i32 : i32, i32
  }
  func.func @transform_1(%arg0: i32) -> (i32, i32) {
    %c0_i32 = arith.constant 0 : i32
    %c0_i32_0 = arith.constant 0 : i32
    %c0_i32_1 = arith.constant 0 : i32
    return %c0_i32, %c0_i32_0 : i32, i32
  }
  func.func @transform_2(%arg0: i32) -> (i32, i32) {
    %c0_i32 = arith.constant 0 : i32
    %c0_i32_0 = arith.constant 0 : i32
    %c0_i32_1 = arith.constant 0 : i32
    return %c0_i32, %c0_i32_0 : i32, i32
  }
  func.func @transform_3(%arg0: i32) -> (i32, i32) {
    %c0_i32 = arith.constant 0 : i32
    %c0_i32_0 = arith.constant 0 : i32
    return %arg0, %c0_i32 : i32, i32
  }
}

</mosaic_0001>

<llo_original>
// kernel: _lambda_.1
$region0: #{_lambda_.1}
  #allocation0 [shape = 'u32[]', space=smem, size = 0x4, offset = 0x4, fixed_abs, tag = 'smem constant byte address 0x4 - core index']
  #allocation1 [shape = 'u32[144,128]{1,0:T(1,128)}', space=vmem, size = 0x12000, scoped, tag = 'internal scratch']
  %s0 = inlined_call_operand.hbm [shape: f32[512,4], index: 0, kind: input, shape index: {}]
  %s1 = inlined_call_operand.hbm [shape: f32[4,16], index: 1, kind: input, shape index: {}]
  %s2 = inlined_call_operand.hbm [shape: f32[1,16], index: 2, kind: input, shape index: {}]
  %s3 = inlined_call_operand.hbm [shape: f32[512,16], index: 3, kind: output, shape index: {}]
  %s4 = sld [smem:[#allocation0]]
  $region34: #{_lambda_.1} parent=0
    _
  %s6 = ssub.s32 1, %s4
  %s7 = scalar_select 0, %s6, %s4
  $region1: #{_lambda_.1} parent=0
    #allocation2 [shape = 'u8[262144]{0}', space=vmem, size = 0x40000, scoped, tag = 'input window, operand 0, single buffered']
    #allocation3 [shape = 's32[1]{0}', space=sflag, size = 0x4, scoped, tag = 'scoped memory for _lambda_.1']
    #allocation4 [shape = 's32[1]{0}', space=sflag, size = 0x4, scoped, tag = 'scoped memory for _lambda_.1']
    #allocation5 [shape = 'u8[2048]{0}', space=vmem, size = 0x800, scoped, tag = 'input window, operand 1, single buffered']
    #allocation6 [shape = 's32[1]{0}', space=sflag, size = 0x4, scoped, tag = 'scoped memory for _lambda_.1']
    #allocation7 [shape = 'u8[512]{0}', space=vmem, size = 0x400, scoped, tag = 'input window, operand 2, single buffered']
    #allocation8 [shape = 'u8[262144]{0}', space=vmem, size = 0x40000, scoped, tag = 'output window, operand 0, single buffered']
    %8 = vsyncpa [#allocation3], 0
    %9 = vsyncpa [#allocation6], 0
    %10 = vsyncpa [#allocation4], 0
    // Predicated region
    $region2: #{_lambda_.1} parent=1 // pred_check
      _
    $region3: #{_lambda_.1} parent=1 // pred_check_branch
      %12 = sbr.rel (0) target = $region5
    $region4: #{_lambda_.1} parent=1 // pred_region
      %s14 = ssub.s32 8192, 8192
      %15 = vsyncadd [#allocation3], %s14
      %s16 = sshll.u32 [#allocation2], 4
      %s17 = int_to_ptr.vmem [resolvable:$true] %s16
      %22 = dma.hbm_to_vmem [thread:$0]  %s0, 8192, %s17, [#allocation3], 128, 128, 8
    $region5: #{_lambda_.1} parent=1 // pred_fallthru
      _
    // Predicated region
    $region6: #{_lambda_.1} parent=1 // pred_check
      _
    $region7: #{_lambda_.1} parent=1 // pred_check_branch
      %24 = sbr.rel (0) target = $region9
    $region8: #{_lambda_.1} parent=1 // pred_region
      %s26 = ssub.s32 64, 64
      %27 = vsyncadd [#allocation6], %s26
      %s29 = sshll.u32 [#allocation5], 4
      %s30 = int_to_ptr.vmem [resolvable:$true] %s29
      %32 = dma.hbm_to_vmem [thread:$0]  %s1, 64, %s30, [#allocation6]
    $region9: #{_lambda_.1} parent=1 // pred_fallthru
      _
    // Predicated region
    $region10: #{_lambda_.1} parent=1 // pred_check
      _
    $region11: #{_lambda_.1} parent=1 // pred_check_branch
      %34 = sbr.rel (0) target = $region13
    $region12: #{_lambda_.1} parent=1 // pred_region
      %s36 = ssub.s32 16, 16
      %37 = vsyncadd [#allocation6], %s36
      %s39 = sshll.u32 [#allocation7], 4
      %s40 = int_to_ptr.vmem [resolvable:$true] %s39
      %42 = dma.hbm_to_vmem [thread:$0]  %s2, 16, %s40, [#allocation6]
    $region13: #{_lambda_.1} parent=1 // pred_fallthru
      _
    // Predicated region
    $region14: #{_lambda_.1} parent=1 // pred_check
      _
    $region15: #{_lambda_.1} parent=1 // pred_check_branch
      %44 = sbr.rel (0) target = $region17
    $region16: #{_lambda_.1} parent=1 // pred_region
      %45 = dma.done [#allocation3], 8192
    $region17: #{_lambda_.1} parent=1 // pred_fallthru
      _
    // Predicated region
    $region18: #{_lambda_.1} parent=1 // pred_check
      _
    $region19: #{_lambda_.1} parent=1 // pred_check_branch
      %47 = sbr.rel (0) target = $region21
    $region20: #{_lambda_.1} parent=1 // pred_region
      %48 = dma.done [#allocation6], 64
    $region21: #{_lambda_.1} parent=1 // pred_fallthru
      _
    // Predicated region
    $region22: #{_lambda_.1} parent=1 // pred_check
      _
    $region23: #{_lambda_.1} parent=1 // pred_check_branch
      %50 = sbr.rel (0) target = $region25
    $region24: #{_lambda_.1} parent=1 // pred_region
      %51 = dma.done [#allocation6], 16
    $region25: #{_lambda_.1} parent=1 // pred_fallthru
      _
    %v52 = vld [vmem:[#allocation2] sm:$0xff]
    %v53 = vld [vmem:[#allocation2 + $0x8] sm:$0xff]
    %v54 = vld [vmem:[#allocation2 + $0x10] sm:$0xff]
    %v55 = vld [vmem:[#allocation2 + $0x18] sm:$0xff]
    %v56 = vld [vmem:[#allocation2 + $0x20] sm:$0xff]
    %v57 = vld [vmem:[#allocation2 + $0x28] sm:$0xff]
    %v58 = vld [vmem:[#allocation2 + $0x30] sm:$0xff]
    %v59 = vld [vmem:[#allocation2 + $0x38] sm:$0xff]
    %v60 = vld [vmem:[#allocation2 + $0x40] sm:$0xff]
    %v61 = vld [vmem:[#allocation2 + $0x48] sm:$0xff]
    %v62 = vld [vmem:[#allocation2 + $0x50] sm:$0xff]
    %v63 = vld [vmem:[#allocation2 + $0x58] sm:$0xff]
    %v64 = vld [vmem:[#allocation2 + $0x60] sm:$0xff]
    %v65 = vld [vmem:[#allocation2 + $0x68] sm:$0xff]
    %v66 = vld [vmem:[#allocation2 + $0x70] sm:$0xff]
    %v67 = vld [vmem:[#allocation2 + $0x78] sm:$0xff]
    %v68 = vld [vmem:[#allocation2 + $0x80] sm:$0xff]
    %v69 = vld [vmem:[#allocation2 + $0x88] sm:$0xff]
    %v70 = vld [vmem:[#allocation2 + $0x90] sm:$0xff]
    %v71 = vld [vmem:[#allocation2 + $0x98] sm:$0xff]
    %v72 = vld [vmem:[#allocation2 + $0xa0] sm:$0xff]
    %v73 = vld [vmem:[#allocation2 + $0xa8] sm:$0xff]
    %v74 = vld [vmem:[#allocation2 + $0xb0] sm:$0xff]
    %v75 = vld [vmem:[#allocation2 + $0xb8] sm:$0xff]
    %v76 = vld [vmem:[#allocation2 + $0xc0] sm:$0xff]
    %v77 = vld [vmem:[#allocation2 + $0xc8] sm:$0xff]
    %v78 = vld [vmem:[#allocation2 + $0xd0] sm:$0xff]
    %v79 = vld [vmem:[#allocation2 + $0xd8] sm:$0xff]
    %v80 = vld [vmem:[#allocation2 + $0xe0] sm:$0xff]
    %v81 = vld [vmem:[#allocation2 + $0xe8] sm:$0xff]
    %v82 = vld [vmem:[#allocation2 + $0xf0] sm:$0xff]
    %v83 = vld [vmem:[#allocation2 + $0xf8] sm:$0xff]
    %v84 = vld [vmem:[#allocation2 + $0x100] sm:$0xff]
    %v85 = vld [vmem:[#allocation2 + $0x108] sm:$0xff]
    %v86 = vld [vmem:[#allocation2 + $0x110] sm:$0xff]
    %v87 = vld [vmem:[#allocation2 + $0x118] sm:$0xff]
    %v88 = vld [vmem:[#allocation2 + $0x120] sm:$0xff]
    %v89 = vld [vmem:[#allocation2 + $0x128] sm:$0xff]
    %v90 = vld [vmem:[#allocation2 + $0x130] sm:$0xff]
    %v91 = vld [vmem:[#allocation2 + $0x138] sm:$0xff]
    %v92 = vld [vmem:[#allocation2 + $0x140] sm:$0xff]
    %v93 = vld [vmem:[#allocation2 + $0x148] sm:$0xff]
    %v94 = vld [vmem:[#allocation2 + $0x150] sm:$0xff]
    %v95 = vld [vmem:[#allocation2 + $0x158] sm:$0xff]
    %v96 = vld [vmem:[#allocation2 + $0x160] sm:$0xff]
    %v97 = vld [vmem:[#allocation2 + $0x168] sm:$0xff]
    %v98 = vld [vmem:[#allocation2 + $0x170] sm:$0xff]
    %v99 = vld [vmem:[#allocation2 + $0x178] sm:$0xff]
    %v100 = vld [vmem:[#allocation2 + $0x180] sm:$0xff]
    %v101 = vld [vmem:[#allocation2 + $0x188] sm:$0xff]
    %v102 = vld [vmem:[#allocation2 + $0x190] sm:$0xff]
    %v103 = vld [vmem:[#allocation2 + $0x198] sm:$0xff]
    %v104 = vld [vmem:[#allocation2 + $0x1a0] sm:$0xff]
    %v105 = vld [vmem:[#allocation2 + $0x1a8] sm:$0xff]
    %v106 = vld [vmem:[#allocation2 + $0x1b0] sm:$0xff]
    %v107 = vld [vmem:[#allocation2 + $0x1b8] sm:$0xff]
    %v108 = vld [vmem:[#allocation2 + $0x1c0] sm:$0xff]
    %v109 = vld [vmem:[#allocation2 + $0x1c8] sm:$0xff]
    %v110 = vld [vmem:[#allocation2 + $0x1d0] sm:$0xff]
    %v111 = vld [vmem:[#allocation2 + $0x1d8] sm:$0xff]
    %v112 = vld [vmem:[#allocation2 + $0x1e0] sm:$0xff]
    %v113 = vld [vmem:[#allocation2 + $0x1e8] sm:$0xff]
    %v114 = vld [vmem:[#allocation2 + $0x1f0] sm:$0xff]
    %v115 = vld [vmem:[#allocation2 + $0x1f8] sm:$0xff]
    %v116 = vld [vmem:[#allocation5] sm:$0xf]
    %v117 = vld [vmem:[#allocation7] sm:$0x1]
    %v119 = vlaneseq
    %v120 = vshrl.u32 %v119, 7
    %v121 = vsub.s32 0, %v120
    %v122 = vrot.slane %v117, %v121
    %vm124 = vcmask 31744
    %v126 = vsel %vm124, %v52, 0
    %v129 = vsel %vm124, %v53, 0
    %v132 = vsel %vm124, %v54, 0
    %v135 = vsel %vm124, %v55, 0
    %v138 = vsel %vm124, %v56, 0
    %v141 = vsel %vm124, %v57, 0
    %v144 = vsel %vm124, %v58, 0
    %v147 = vsel %vm124, %v59, 0
    %v150 = vsel %vm124, %v60, 0
    %v153 = vsel %vm124, %v61, 0
    %v156 = vsel %vm124, %v62, 0
    %v159 = vsel %vm124, %v63, 0
    %v162 = vsel %vm124, %v64, 0
    %v165 = vsel %vm124, %v65, 0
    %v168 = vsel %vm124, %v66, 0
    %v171 = vsel %vm124, %v67, 0
    %v174 = vsel %vm124, %v68, 0
    %v177 = vsel %vm124, %v69, 0
    %v180 = vsel %vm124, %v70, 0
    %v183 = vsel %vm124, %v71, 0
    %v186 = vsel %vm124, %v72, 0
    %v189 = vsel %vm124, %v73, 0
    %v192 = vsel %vm124, %v74, 0
    %v195 = vsel %vm124, %v75, 0
    %v198 = vsel %vm124, %v76, 0
    %v201 = vsel %vm124, %v77, 0
    %v204 = vsel %vm124, %v78, 0
    %v207 = vsel %vm124, %v79, 0
    %v210 = vsel %vm124, %v80, 0
    %v213 = vsel %vm124, %v81, 0
    %v216 = vsel %vm124, %v82, 0
    %v219 = vsel %vm124, %v83, 0
    %v222 = vsel %vm124, %v84, 0
    %v225 = vsel %vm124, %v85, 0
    %v228 = vsel %vm124, %v86, 0
    %v231 = vsel %vm124, %v87, 0
    %v234 = vsel %vm124, %v88, 0
    %v237 = vsel %vm124, %v89, 0
    %v240 = vsel %vm124, %v90, 0
    %v243 = vsel %vm124, %v91, 0
    %v246 = vsel %vm124, %v92, 0
    %v249 = vsel %vm124, %v93, 0
    %v252 = vsel %vm124, %v94, 0
    %v255 = vsel %vm124, %v95, 0
    %v258 = vsel %vm124, %v96, 0
    %v261 = vsel %vm124, %v97, 0
    %v264 = vsel %vm124, %v98, 0
    %v267 = vsel %vm124, %v99, 0
    %v270 = vsel %vm124, %v100, 0
    %v273 = vsel %vm124, %v101, 0
    %v276 = vsel %vm124, %v102, 0
    %v279 = vsel %vm124, %v103, 0
    %v282 = vsel %vm124, %v104, 0
    %v285 = vsel %vm124, %v105, 0
    %v288 = vsel %vm124, %v106, 0
    %v291 = vsel %vm124, %v107, 0
    %v294 = vsel %vm124, %v108, 0
    %v297 = vsel %vm124, %v109, 0
    %v300 = vsel %vm124, %v110, 0
    %v303 = vsel %vm124, %v111, 0
    %v306 = vsel %vm124, %v112, 0
    %v309 = vsel %vm124, %v113, 0
    %v312 = vsel %vm124, %v114, 0
    %v315 = vsel %vm124, %v115, 0
    %vm317 = vcmask 1043456
    %v319 = vsel %vm317, %v116, 0
    %321 = vmatprep.subr.mxu0 0.0
    %322 = vmatpush1.msra.mxu0 %v319
    %323 = vmatprep.subr.mxu0 0.0
    %324 = vmatpush1.msra.mxu0 0.0
    %325 = vmatprep.subr.mxu0 0.0
    %326 = vmatpush1.msra.mxu0 0.0
    %327 = vmatprep.subr.mxu0 0.0
    %328 = vmatpush1.msra.mxu0 0.0
    %329 = vmatprep.subr.mxu0 0.0
    %330 = vmatpush1.msra.mxu0 0.0
    %331 = vmatprep.subr.mxu0 0.0
    %332 = vmatpush1.msra.mxu0 0.0
    %333 = vmatprep.subr.mxu0 0.0
    %334 = vmatpush1.msra.mxu0 0.0
    %335 = vmatprep.subr.mxu0 0.0
    %336 = vmatpush1.msra.mxu0 0.0
    %337 = vmatprep.subr.mxu0 0.0
    %338 = vmatpush1.msra.mxu0 0.0
    %339 = vmatprep.subr.mxu0 0.0
    %340 = vmatpush1.msra.mxu0 0.0
    %341 = vmatprep.subr.mxu0 0.0
    %342 = vmatpush1.msra.mxu0 0.0
    %343 = vmatprep.subr.mxu0 0.0
    %344 = vmatpush1.msra.mxu0 0.0
    %345 = vmatprep.subr.mxu0 0.0
    %346 = vmatpush1.msra.mxu0 0.0
    %347 = vmatprep.subr.mxu0 0.0
    %348 = vmatpush1.msra.mxu0 0.0
    %349 = vmatprep.subr.mxu0 0.0
    %350 = vmatpush1.msra.mxu0 0.0
    %351 = vmatprep.subr.mxu0 0.0
    %352 = vmatpush1.msra.mxu0 0.0
    %353 = vmatprep.subr.mxu0 0.0
    %354 = vmatpush1.msra.mxu0 0.0
    %355 = vmatprep.subr.mxu0 0.0
    %356 = vmatpush1.msra.mxu0 0.0
    %357 = vmatprep.subr.mxu0 0.0
    %358 = vmatpush1.msra.mxu0 0.0
    %359 = vmatprep.subr.mxu0 0.0
    %360 = vmatpush1.msra.mxu0 0.0
    %361 = vmatprep.subr.mxu0 0.0
    %362 = vmatpush1.msra.mxu0 0.0
    %363 = vmatprep.subr.mxu0 0.0
    %364 = vmatpush1.msra.mxu0 0.0
    %365 = vmatprep.subr.mxu0 0.0
    %366 = vmatpush1.msra.mxu0 0.0
    %367 = vmatprep.subr.mxu0 0.0
    %368 = vmatpush1.msra.mxu0 0.0
    %369 = vmatprep.subr.mxu0 0.0
    %370 = vmatpush1.msra.mxu0 0.0
    %371 = vmatprep.subr.mxu0 0.0
    %372 = vmatpush1.msra.mxu0 0.0
    %373 = vmatprep.subr.mxu0 0.0
    %374 = vmatpush1.msra.mxu0 0.0
    %375 = vmatprep.subr.mxu0 0.0
    %376 = vmatpush1.msra.mxu0 0.0
    %377 = vmatprep.subr.mxu0 0.0
    %378 = vmatpush1.msra.mxu0 0.0
    %379 = vmatprep.subr.mxu0 0.0
    %380 = vmatpush1.msra.mxu0 0.0
    %381 = vmatprep.subr.mxu0 0.0
    %382 = vmatpush1.msra.mxu0 0.0
    %383 = vmatprep.subr.mxu0 0.0
    %384 = vmatpush1.msra.mxu0 0.0
    %385 = vmatprep.mubr.f32.mxu0 0.0
    %386 = vmatmul.mubr.f32.gmra.mrb[0].mxu0 %v126
    %v387 = vpop.f32.mrb[0].mxu0
    %v388 = vadd.f32 %v122, %v387
    %v389 = vpop.f32.mrb[0].mxu0
    %390 = vmatprep.mubr.f32.mxu0 0.0
    %391 = vmatmul.mubr.f32.gmra.mrb[0].mxu0 %v129
    %v392 = vpop.f32.mrb[0].mxu0
    %v393 = vadd.f32 %v122, %v392
    %v394 = vpop.f32.mrb[0].mxu0
    %395 = vmatprep.mubr.f32.mxu0 0.0
    %396 = vmatmul.mubr.f32.gmra.mrb[0].mxu0 %v132
    %v397 = vpop.f32.mrb[0].mxu0
    %v398 = vadd.f32 %v122, %v397
    %v399 = vpop.f32.mrb[0].mxu0
    %400 = vmatprep.mubr.f32.mxu0 0.0
    %401 = vmatmul.mubr.f32.gmra.mrb[0].mxu0 %v135
    %v402 = vpop.f32.mrb[0].mxu0
    %v403 = vadd.f32 %v122, %v402
    %v404 = vpop.f32.mrb[0].mxu0
    %405 = vmatprep.mubr.f32.mxu0 0.0
    %406 = vmatmul.mubr.f32.gmra.mrb[0].mxu0 %v138
    %v407 = vpop.f32.mrb[0].mxu0
    %v408 = vadd.f32 %v122, %v407
    %v409 = vpop.f32.mrb[0].mxu0
    %410 = vmatprep.mubr.f32.mxu0 0.0
    %411 = vmatmul.mubr.f32.gmra.mrb[0].mxu0 %v141
    %v412 = vpop.f32.mrb[0].mxu0
    %v413 = vadd.f32 %v122, %v412
    %v414 = vpop.f32.mrb[0].mxu0
    %415 = vmatprep.mubr.f32.mxu0 0.0
    %416 = vmatmul.mubr.f32.gmra.mrb[0].mxu0 %v144
    %v417 = vpop.f32.mrb[0].mxu0
    %v418 = vadd.f32 %v122, %v417
    %v419 = vpop.f32.mrb[0].mxu0
    %420 = vmatprep.mubr.f32.mxu0 0.0
    %421 = vmatmul.mubr.f32.gmra.mrb[0].mxu0 %v147
    %v422 = vpop.f32.mrb[0].mxu0
    %v423 = vadd.f32 %v122, %v422
    %v424 = vpop.f32.mrb[0].mxu0
    %425 = vmatprep.mubr.f32.mxu0 0.0
    %426 = vmatmul.mubr.f32.gmra.mrb[0].mxu0 %v150
    %v427 = vpop.f32.mrb[0].mxu0
    %v428 = vadd.f32 %v122, %v427
    %v429 = vpop.f32.mrb[0].mxu0
    %430 = vmatprep.mubr.f32.mxu0 0.0
    %431 = vmatmul.mubr.f32.gmra.mrb[0].mxu0 %v153
    %v432 = vpop.f32.mrb[0].mxu0
    %v433 = vadd.f32 %v122, %v432
    %v434 = vpop.f32.mrb[0].mxu0
    %435 = vmatprep.mubr.f32.mxu0 0.0
    %436 = vmatmul.mubr.f32.gmra.mrb[0].mxu0 %v156
    %v437 = vpop.f32.mrb[0].mxu0
    %v438 = vadd.f32 %v122, %v437
    %v439 = vpop.f32.mrb[0].mxu0
    %440 = vmatprep.mubr.f32.mxu0 0.0
    %441 = vmatmul.mubr.f32.gmra.mrb[0].mxu0 %v159
    %v442 = vpop.f32.mrb[0].mxu0
    %v443 = vadd.f32 %v122, %v442
    %v444 = vpop.f32.mrb[0].mxu0
    %445 = vmatprep.mubr.f32.mxu0 0.0
    %446 = vmatmul.mubr.f32.gmra.mrb[0].mxu0 %v162
    %v447 = vpop.f32.mrb[0].mxu0
    %v448 = vadd.f32 %v122, %v447
    %v449 = vpop.f32.mrb[0].mxu0
    %450 = vmatprep.mubr.f32.mxu0 0.0
    %451 = vmatmul.mubr.f32.gmra.mrb[0].mxu0 %v165
    %v452 = vpop.f32.mrb[0].mxu0
    %v453 = vadd.f32 %v122, %v452
    %v454 = vpop.f32.mrb[0].mxu0
    %455 = vmatprep.mubr.f32.mxu0 0.0
    %456 = vmatmul.mubr.f32.gmra.mrb[0].mxu0 %v168
    %v457 = vpop.f32.mrb[0].mxu0
    %v458 = vadd.f32 %v122, %v457
    %v459 = vpop.f32.mrb[0].mxu0
    %460 = vmatprep.mubr.f32.mxu0 0.0
    %461 = vmatmul.mubr.f32.gmra.mrb[0].mxu0 %v171
    %v462 = vpop.f32.mrb[0].mxu0
    %v463 = vadd.f32 %v122, %v462
    %v464 = vpop.f32.mrb[0].mxu0
    %465 = vmatprep.mubr.f32.mxu0 0.0
    %466 = vmatmul.mubr.f32.gmra.mrb[0].mxu0 %v174
    %v467 = vpop.f32.mrb[0].mxu0
    %v468 = vadd.f32 %v122, %v467
    %v469 = vpop.f32.mrb[0].mxu0
    %470 = vmatprep.mubr.f32.mxu0 0.0
    %471 = vmatmul.mubr.f32.gmra.mrb[0].mxu0 %v177
    %v472 = vpop.f32.mrb[0].mxu0
    %v473 = vadd.f32 %v122, %v472
    %v474 = vpop.f32.mrb[0].mxu0
    %475 = vmatprep.mubr.f32.mxu0 0.0
    %476 = vmatmul.mubr.f32.gmra.mrb[0].mxu0 %v180
    %v477 = vpop.f32.mrb[0].mxu0
    %v478 = vadd.f32 %v122, %v477
    %v479 = vpop.f32.mrb[0].mxu0
    %480 = vmatprep.mubr.f32.mxu0 0.0
    %481 = vmatmul.mubr.f32.gmra.mrb[0].mxu0 %v183
    %v482 = vpop.f32.mrb[0].mxu0
    %v483 = vadd.f32 %v122, %v482
    %v484 = vpop.f32.mrb[0].mxu0
    %485 = vmatprep.mubr.f32.mxu0 0.0
    %486 = vmatmul.mubr.f32.gmra.mrb[0].mxu0 %v186
    %v487 = vpop.f32.mrb[0].mxu0
    %v488 = vadd.f32 %v122, %v487
    %v489 = vpop.f32.mrb[0].mxu0
    %490 = vmatprep.mubr.f32.mxu0 0.0
    %491 = vmatmul.mubr.f32.gmra.mrb[0].mxu0 %v189
    %v492 = vpop.f32.mrb[0].mxu0
    %v493 = vadd.f32 %v122, %v492
    %v494 = vpop.f32.mrb[0].mxu0
    %495 = vmatprep.mubr.f32.mxu0 0.0
    %496 = vmatmul.mubr.f32.gmra.mrb[0].mxu0 %v192
    %v497 = vpop.f32.mrb[0].mxu0
    %v498 = vadd.f32 %v122, %v497
    %v499 = vpop.f32.mrb[0].mxu0
    %500 = vmatprep.mubr.f32.mxu0 0.0
    %501 = vmatmul.mubr.f32.gmra.mrb[0].mxu0 %v195
    %v502 = vpop.f32.mrb[0].mxu0
    %v503 = vadd.f32 %v122, %v502
    %v504 = vpop.f32.mrb[0].mxu0
    %505 = vmatprep.mubr.f32.mxu0 0.0
    %506 = vmatmul.mubr.f32.gmra.mrb[0].mxu0 %v198
    %v507 = vpop.f32.mrb[0].mxu0
    %v508 = vadd.f32 %v122, %v507
    %v509 = vpop.f32.mrb[0].mxu0
    %510 = vmatprep.mubr.f32.mxu0 0.0
    %511 = vmatmul.mubr.f32.gmra.mrb[0].mxu0 %v201
    %v512 = vpop.f32.mrb[0].mxu0
    %v513 = vadd.f32 %v122, %v512
    %v514 = vpop.f32.mrb[0].mxu0
    %515 = vmatprep.mubr.f32.mxu0 0.0
    %516 = vmatmul.mubr.f32.gmra.mrb[0].mxu0 %v204
    %v517 = vpop.f32.mrb[0].mxu0
    %v518 = vadd.f32 %v122, %v517
    %v519 = vpop.f32.mrb[0].mxu0
    %520 = vmatprep.mubr.f32.mxu0 0.0
    %521 = vmatmul.mubr.f32.gmra.mrb[0].mxu0 %v207
    %v522 = vpop.f32.mrb[0].mxu0
    %v523 = vadd.f32 %v122, %v522
    %v524 = vpop.f32.mrb[0].mxu0
    %525 = vmatprep.mubr.f32.mxu0 0.0
    %526 = vmatmul.mubr.f32.gmra.mrb[0].mxu0 %v210
    %v527 = vpop.f32.mrb[0].mxu0
    %v528 = vadd.f32 %v122, %v527
    %v529 = vpop.f32.mrb[0].mxu0
    %530 = vmatprep.mubr.f32.mxu0 0.0
    %531 = vmatmul.mubr.f32.gmra.mrb[0].mxu0 %v213
    %v532 = vpop.f32.mrb[0].mxu0
    %v533 = vadd.f32 %v122, %v532
    %v534 = vpop.f32.mrb[0].mxu0
    %535 = vmatprep.mubr.f32.mxu0 0.0
    %536 = vmatmul.mubr.f32.gmra.mrb[0].mxu0 %v216
    %v537 = vpop.f32.mrb[0].mxu0
    %v538 = vadd.f32 %v122, %v537
    %v539 = vpop.f32.mrb[0].mxu0
    %540 = vmatprep.mubr.f32.mxu0 0.0
    %541 = vmatmul.mubr.f32.gmra.mrb[0].mxu0 %v219
    %v542 = vpop.f32.mrb[0].mxu0
    %v543 = vadd.f32 %v122, %v542
    %v544 = vpop.f32.mrb[0].mxu0
    %545 = vmatprep.mubr.f32.mxu0 0.0
    %546 = vmatmul.mubr.f32.gmra.mrb[0].mxu0 %v222
    %v547 = vpop.f32.mrb[0].mxu0
    %v548 = vadd.f32 %v122, %v547
    %v549 = vpop.f32.mrb[0].mxu0
    %550 = vmatprep.mubr.f32.mxu0 0.0
    %551 = vmatmul.mubr.f32.gmra.mrb[0].mxu0 %v225
    %v552 = vpop.f32.mrb[0].mxu0
    %v553 = vadd.f32 %v122, %v552
    %v554 = vpop.f32.mrb[0].mxu0
    %555 = vmatprep.mubr.f32.mxu0 0.0
    %556 = vmatmul.mubr.f32.gmra.mrb[0].mxu0 %v228
    %v557 = vpop.f32.mrb[0].mxu0
    %v558 = vadd.f32 %v122, %v557
    %v559 = vpop.f32.mrb[0].mxu0
    %560 = vmatprep.mubr.f32.mxu0 0.0
    %561 = vmatmul.mubr.f32.gmra.mrb[0].mxu0 %v231
    %v562 = vpop.f32.mrb[0].mxu0
    %v563 = vadd.f32 %v122, %v562
    %v564 = vpop.f32.mrb[0].mxu0
    %565 = vmatprep.mubr.f32.mxu0 0.0
    %566 = vmatmul.mubr.f32.gmra.mrb[0].mxu0 %v234
    %v567 = vpop.f32.mrb[0].mxu0
    %v568 = vadd.f32 %v122, %v567
    %v569 = vpop.f32.mrb[0].mxu0
    %570 = vmatprep.mubr.f32.mxu0 0.0
    %571 = vmatmul.mubr.f32.gmra.mrb[0].mxu0 %v237
    %v572 = vpop.f32.mrb[0].mxu0
    %v573 = vadd.f32 %v122, %v572
    %v574 = vpop.f32.mrb[0].mxu0
    %575 = vmatprep.mubr.f32.mxu0 0.0
    %576 = vmatmul.mubr.f32.gmra.mrb[0].mxu0 %v240
    %v577 = vpop.f32.mrb[0].mxu0
    %v578 = vadd.f32 %v122, %v577
    %v579 = vpop.f32.mrb[0].mxu0
    %580 = vmatprep.mubr.f32.mxu0 0.0
    %581 = vmatmul.mubr.f32.gmra.mrb[0].mxu0 %v243
    %v582 = vpop.f32.mrb[0].mxu0
    %v583 = vadd.f32 %v122, %v582
    %v584 = vpop.f32.mrb[0].mxu0
    %585 = vmatprep.mubr.f32.mxu0 0.0
    %586 = vmatmul.mubr.f32.gmra.mrb[0].mxu0 %v246
    %v587 = vpop.f32.mrb[0].mxu0
    %v588 = vadd.f32 %v122, %v587
    %v589 = vpop.f32.mrb[0].mxu0
    %590 = vmatprep.mubr.f32.mxu0 0.0
    %591 = vmatmul.mubr.f32.gmra.mrb[0].mxu0 %v249
    %v592 = vpop.f32.mrb[0].mxu0
    %v593 = vadd.f32 %v122, %v592
    %v594 = vpop.f32.mrb[0].mxu0
    %595 = vmatprep.mubr.f32.mxu0 0.0
    %596 = vmatmul.mubr.f32.gmra.mrb[0].mxu0 %v252
    %v597 = vpop.f32.mrb[0].mxu0
    %v598 = vadd.f32 %v122, %v597
    %v599 = vpop.f32.mrb[0].mxu0
    %600 = vmatprep.mubr.f32.mxu0 0.0
    %601 = vmatmul.mubr.f32.gmra.mrb[0].mxu0 %v255
    %v602 = vpop.f32.mrb[0].mxu0
    %v603 = vadd.f32 %v122, %v602
    %v604 = vpop.f32.mrb[0].mxu0
    %605 = vmatprep.mubr.f32.mxu0 0.0
    %606 = vmatmul.mubr.f32.gmra.mrb[0].mxu0 %v258
    %v607 = vpop.f32.mrb[0].mxu0
    %v608 = vadd.f32 %v122, %v607
    %v609 = vpop.f32.mrb[0].mxu0
    %610 = vmatprep.mubr.f32.mxu0 0.0
    %611 = vmatmul.mubr.f32.gmra.mrb[0].mxu0 %v261
    %v612 = vpop.f32.mrb[0].mxu0
    %v613 = vadd.f32 %v122, %v612
    %v614 = vpop.f32.mrb[0].mxu0
    %615 = vmatprep.mubr.f32.mxu0 0.0
    %616 = vmatmul.mubr.f32.gmra.mrb[0].mxu0 %v264
    %v617 = vpop.f32.mrb[0].mxu0
    %v618 = vadd.f32 %v122, %v617
    %v619 = vpop.f32.mrb[0].mxu0
    %620 = vmatprep.mubr.f32.mxu0 0.0
    %621 = vmatmul.mubr.f32.gmra.mrb[0].mxu0 %v267
    %v622 = vpop.f32.mrb[0].mxu0
    %v623 = vadd.f32 %v122, %v622
    %v624 = vpop.f32.mrb[0].mxu0
    %625 = vmatprep.mubr.f32.mxu0 0.0
    %626 = vmatmul.mubr.f32.gmra.mrb[0].mxu0 %v270
    %v627 = vpop.f32.mrb[0].mxu0
    %v628 = vadd.f32 %v122, %v627
    %v629 = vpop.f32.mrb[0].mxu0
    %630 = vmatprep.mubr.f32.mxu0 0.0
    %631 = vmatmul.mubr.f32.gmra.mrb[0].mxu0 %v273
    %v632 = vpop.f32.mrb[0].mxu0
    %v633 = vadd.f32 %v122, %v632
    %v634 = vpop.f32.mrb[0].mxu0
    %635 = vmatprep.mubr.f32.mxu0 0.0
    %636 = vmatmul.mubr.f32.gmra.mrb[0].mxu0 %v276
    %v637 = vpop.f32.mrb[0].mxu0
    %v638 = vadd.f32 %v122, %v637
    %v639 = vpop.f32.mrb[0].mxu0
    %640 = vmatprep.mubr.f32.mxu0 0.0
    %641 = vmatmul.mubr.f32.gmra.mrb[0].mxu0 %v279
    %v642 = vpop.f32.mrb[0].mxu0
    %v643 = vadd.f32 %v122, %v642
    %v644 = vpop.f32.mrb[0].mxu0
    %645 = vmatprep.mubr.f32.mxu0 0.0
    %646 = vmatmul.mubr.f32.gmra.mrb[0].mxu0 %v282
    %v647 = vpop.f32.mrb[0].mxu0
    %v648 = vadd.f32 %v122, %v647
    %v649 = vpop.f32.mrb[0].mxu0
    %650 = vmatprep.mubr.f32.mxu0 0.0
    %651 = vmatmul.mubr.f32.gmra.mrb[0].mxu0 %v285
    %v652 = vpop.f32.mrb[0].mxu0
    %v653 = vadd.f32 %v122, %v652
    %v654 = vpop.f32.mrb[0].mxu0
    %655 = vmatprep.mubr.f32.mxu0 0.0
    %656 = vmatmul.mubr.f32.gmra.mrb[0].mxu0 %v288
    %v657 = vpop.f32.mrb[0].mxu0
    %v658 = vadd.f32 %v122, %v657
    %v659 = vpop.f32.mrb[0].mxu0
    %660 = vmatprep.mubr.f32.mxu0 0.0
    %661 = vmatmul.mubr.f32.gmra.mrb[0].mxu0 %v291
    %v662 = vpop.f32.mrb[0].mxu0
    %v663 = vadd.f32 %v122, %v662
    %v664 = vpop.f32.mrb[0].mxu0
    %665 = vmatprep.mubr.f32.mxu0 0.0
    %666 = vmatmul.mubr.f32.gmra.mrb[0].mxu0 %v294
    %v667 = vpop.f32.mrb[0].mxu0
    %v668 = vadd.f32 %v122, %v667
    %v669 = vpop.f32.mrb[0].mxu0
    %670 = vmatprep.mubr.f32.mxu0 0.0
    %671 = vmatmul.mubr.f32.gmra.mrb[0].mxu0 %v297
    %v672 = vpop.f32.mrb[0].mxu0
    %v673 = vadd.f32 %v122, %v672
    %v674 = vpop.f32.mrb[0].mxu0
    %675 = vmatprep.mubr.f32.mxu0 0.0
    %676 = vmatmul.mubr.f32.gmra.mrb[0].mxu0 %v300
    %v677 = vpop.f32.mrb[0].mxu0
    %v678 = vadd.f32 %v122, %v677
    %v679 = vpop.f32.mrb[0].mxu0
    %680 = vmatprep.mubr.f32.mxu0 0.0
    %681 = vmatmul.mubr.f32.gmra.mrb[0].mxu0 %v303
    %v682 = vpop.f32.mrb[0].mxu0
    %v683 = vadd.f32 %v122, %v682
    %v684 = vpop.f32.mrb[0].mxu0
    %685 = vmatprep.mubr.f32.mxu0 0.0
    %686 = vmatmul.mubr.f32.gmra.mrb[0].mxu0 %v306
    %v687 = vpop.f32.mrb[0].mxu0
    %v688 = vadd.f32 %v122, %v687
    %v689 = vpop.f32.mrb[0].mxu0
    %690 = vmatprep.mubr.f32.mxu0 0.0
    %691 = vmatmul.mubr.f32.gmra.mrb[0].mxu0 %v309
    %v692 = vpop.f32.mrb[0].mxu0
    %v693 = vadd.f32 %v122, %v692
    %v694 = vpop.f32.mrb[0].mxu0
    %695 = vmatprep.mubr.f32.mxu0 0.0
    %696 = vmatmul.mubr.f32.gmra.mrb[0].mxu0 %v312
    %v697 = vpop.f32.mrb[0].mxu0
    %v698 = vadd.f32 %v122, %v697
    %v699 = vpop.f32.mrb[0].mxu0
    %700 = vmatprep.mubr.f32.mxu0 0.0
    %701 = vmatmul.mubr.f32.gmra.mrb[0].mxu0 %v315
    %v702 = vpop.f32.mrb[0].mxu0
    %v703 = vadd.f32 %v122, %v702
    %v704 = vpop.f32.mrb[0].mxu0
    %705 = vdwg.mxu0
    %v706 = vmax.f32 %v388, 0.0
    %v707 = vmax.f32 %v393, 0.0
    %v708 = vmax.f32 %v398, 0.0
    %v709 = vmax.f32 %v403, 0.0
    %v710 = vmax.f32 %v408, 0.0
    %v711 = vmax.f32 %v413, 0.0
    %v712 = vmax.f32 %v418, 0.0
    %v713 = vmax.f32 %v423, 0.0
    %v714 = vmax.f32 %v428, 0.0
    %v715 = vmax.f32 %v433, 0.0
    %v716 = vmax.f32 %v438, 0.0
    %v717 = vmax.f32 %v443, 0.0
    %v718 = vmax.f32 %v448, 0.0
    %v719 = vmax.f32 %v453, 0.0
    %v720 = vmax.f32 %v458, 0.0
    %v721 = vmax.f32 %v463, 0.0
    %v722 = vmax.f32 %v468, 0.0
    %v723 = vmax.f32 %v473, 0.0
    %v724 = vmax.f32 %v478, 0.0
    %v725 = vmax.f32 %v483, 0.0
    %v726 = vmax.f32 %v488, 0.0
    %v727 = vmax.f32 %v493, 0.0
    %v728 = vmax.f32 %v498, 0.0
    %v729 = vmax.f32 %v503, 0.0
    %v730 = vmax.f32 %v508, 0.0
    %v731 = vmax.f32 %v513, 0.0
    %v732 = vmax.f32 %v518, 0.0
    %v733 = vmax.f32 %v523, 0.0
    %v734 = vmax.f32 %v528, 0.0
    %v735 = vmax.f32 %v533, 0.0
    %v736 = vmax.f32 %v538, 0.0
    %v737 = vmax.f32 %v543, 0.0
    %v738 = vmax.f32 %v548, 0.0
    %v739 = vmax.f32 %v553, 0.0
    %v740 = vmax.f32 %v558, 0.0
    %v741 = vmax.f32 %v563, 0.0
    %v742 = vmax.f32 %v568, 0.0
    %v743 = vmax.f32 %v573, 0.0
    %v744 = vmax.f32 %v578, 0.0
    %v745 = vmax.f32 %v583, 0.0
    %v746 = vmax.f32 %v588, 0.0
    %v747 = vmax.f32 %v593, 0.0
    %v748 = vmax.f32 %v598, 0.0
    %v749 = vmax.f32 %v603, 0.0
    %v750 = vmax.f32 %v608, 0.0
    %v751 = vmax.f32 %v613, 0.0
    %v752 = vmax.f32 %v618, 0.0
    %v753 = vmax.f32 %v623, 0.0
    %v754 = vmax.f32 %v628, 0.0
    %v755 = vmax.f32 %v633, 0.0
    %v756 = vmax.f32 %v638, 0.0
    %v757 = vmax.f32 %v643, 0.0
    %v758 = vmax.f32 %v648, 0.0
    %v759 = vmax.f32 %v653, 0.0
    %v760 = vmax.f32 %v658, 0.0
    %v761 = vmax.f32 %v663, 0.0
    %v762 = vmax.f32 %v668, 0.0
    %v763 = vmax.f32 %v673, 0.0
    %v764 = vmax.f32 %v678, 0.0
    %v765 = vmax.f32 %v683, 0.0
    %v766 = vmax.f32 %v688, 0.0
    %v767 = vmax.f32 %v693, 0.0
    %v768 = vmax.f32 %v698, 0.0
    %v769 = vmax.f32 %v703, 0.0
    %vm770 = vcmask 130048
    %771 = vst.msk [vmem:[#allocation8] sm:$0xff] %vm770, %v706
    %772 = vst.msk [vmem:[#allocation8 + $0x8] sm:$0xff] %vm770, %v707
    %773 = vst.msk [vmem:[#allocation8 + $0x10] sm:$0xff] %vm770, %v708
    %774 = vst.msk [vmem:[#allocation8 + $0x18] sm:$0xff] %vm770, %v709
    %775 = vst.msk [vmem:[#allocation8 + $0x20] sm:$0xff] %vm770, %v710
    %776 = vst.msk [vmem:[#allocation8 + $0x28] sm:$0xff] %vm770, %v711
    %777 = vst.msk [vmem:[#allocation8 + $0x30] sm:$0xff] %vm770, %v712
    %778 = vst.msk [vmem:[#allocation8 + $0x38] sm:$0xff] %vm770, %v713
    %779 = vst.msk [vmem:[#allocation8 + $0x40] sm:$0xff] %vm770, %v714
    %780 = vst.msk [vmem:[#allocation8 + $0x48] sm:$0xff] %vm770, %v715
    %781 = vst.msk [vmem:[#allocation8 + $0x50] sm:$0xff] %vm770, %v716
    %782 = vst.msk [vmem:[#allocation8 + $0x58] sm:$0xff] %vm770, %v717
    %783 = vst.msk [vmem:[#allocation8 + $0x60] sm:$0xff] %vm770, %v718
    %784 = vst.msk [vmem:[#allocation8 + $0x68] sm:$0xff] %vm770, %v719
    %785 = vst.msk [vmem:[#allocation8 + $0x70] sm:$0xff] %vm770, %v720
    %786 = vst.msk [vmem:[#allocation8 + $0x78] sm:$0xff] %vm770, %v721
    %787 = vst.msk [vmem:[#allocation8 + $0x80] sm:$0xff] %vm770, %v722
    %788 = vst.msk [vmem:[#allocation8 + $0x88] sm:$0xff] %vm770, %v723
    %789 = vst.msk [vmem:[#allocation8 + $0x90] sm:$0xff] %vm770, %v724
    %790 = vst.msk [vmem:[#allocation8 + $0x98] sm:$0xff] %vm770, %v725
    %791 = vst.msk [vmem:[#allocation8 + $0xa0] sm:$0xff] %vm770, %v726
    %792 = vst.msk [vmem:[#allocation8 + $0xa8] sm:$0xff] %vm770, %v727
    %793 = vst.msk [vmem:[#allocation8 + $0xb0] sm:$0xff] %vm770, %v728
    %794 = vst.msk [vmem:[#allocation8 + $0xb8] sm:$0xff] %vm770, %v729
    %795 = vst.msk [vmem:[#allocation8 + $0xc0] sm:$0xff] %vm770, %v730
    %796 = vst.msk [vmem:[#allocation8 + $0xc8] sm:$0xff] %vm770, %v731
    %797 = vst.msk [vmem:[#allocation8 + $0xd0] sm:$0xff] %vm770, %v732
    %798 = vst.msk [vmem:[#allocation8 + $0xd8] sm:$0xff] %vm770, %v733
    %799 = vst.msk [vmem:[#allocation8 + $0xe0] sm:$0xff] %vm770, %v734
    %800 = vst.msk [vmem:[#allocation8 + $0xe8] sm:$0xff] %vm770, %v735
    %801 = vst.msk [vmem:[#allocation8 + $0xf0] sm:$0xff] %vm770, %v736
    %802 = vst.msk [vmem:[#allocation8 + $0xf8] sm:$0xff] %vm770, %v737
    %803 = vst.msk [vmem:[#allocation8 + $0x100] sm:$0xff] %vm770, %v738
    %804 = vst.msk [vmem:[#allocation8 + $0x108] sm:$0xff] %vm770, %v739
    %805 = vst.msk [vmem:[#allocation8 + $0x110] sm:$0xff] %vm770, %v740
    %806 = vst.msk [vmem:[#allocation8 + $0x118] sm:$0xff] %vm770, %v741
    %807 = vst.msk [vmem:[#allocation8 + $0x120] sm:$0xff] %vm770, %v742
    %808 = vst.msk [vmem:[#allocation8 + $0x128] sm:$0xff] %vm770, %v743
    %809 = vst.msk [vmem:[#allocation8 + $0x130] sm:$0xff] %vm770, %v744
    %810 = vst.msk [vmem:[#allocation8 + $0x138] sm:$0xff] %vm770, %v745
    %811 = vst.msk [vmem:[#allocation8 + $0x140] sm:$0xff] %vm770, %v746
    %812 = vst.msk [vmem:[#allocation8 + $0x148] sm:$0xff] %vm770, %v747
    %813 = vst.msk [vmem:[#allocation8 + $0x150] sm:$0xff] %vm770, %v748
    %814 = vst.msk [vmem:[#allocation8 + $0x158] sm:$0xff] %vm770, %v749
    %815 = vst.msk [vmem:[#allocation8 + $0x160] sm:$0xff] %vm770, %v750
    %816 = vst.msk [vmem:[#allocation8 + $0x168] sm:$0xff] %vm770, %v751
    %817 = vst.msk [vmem:[#allocation8 + $0x170] sm:$0xff] %vm770, %v752
    %818 = vst.msk [vmem:[#allocation8 + $0x178] sm:$0xff] %vm770, %v753
    %819 = vst.msk [vmem:[#allocation8 + $0x180] sm:$0xff] %vm770, %v754
    %820 = vst.msk [vmem:[#allocation8 + $0x188] sm:$0xff] %vm770, %v755
    %821 = vst.msk [vmem:[#allocation8 + $0x190] sm:$0xff] %vm770, %v756
    %822 = vst.msk [vmem:[#allocation8 + $0x198] sm:$0xff] %vm770, %v757
    %823 = vst.msk [vmem:[#allocation8 + $0x1a0] sm:$0xff] %vm770, %v758
    %824 = vst.msk [vmem:[#allocation8 + $0x1a8] sm:$0xff] %vm770, %v759
    %825 = vst.msk [vmem:[#allocation8 + $0x1b0] sm:$0xff] %vm770, %v760
    %826 = vst.msk [vmem:[#allocation8 + $0x1b8] sm:$0xff] %vm770, %v761
    %827 = vst.msk [vmem:[#allocation8 + $0x1c0] sm:$0xff] %vm770, %v762
    %828 = vst.msk [vmem:[#allocation8 + $0x1c8] sm:$0xff] %vm770, %v763
    %829 = vst.msk [vmem:[#allocation8 + $0x1d0] sm:$0xff] %vm770, %v764
    %830 = vst.msk [vmem:[#allocation8 + $0x1d8] sm:$0xff] %vm770, %v765
    %831 = vst.msk [vmem:[#allocation8 + $0x1e0] sm:$0xff] %vm770, %v766
    %832 = vst.msk [vmem:[#allocation8 + $0x1e8] sm:$0xff] %vm770, %v767
    %833 = vst.msk [vmem:[#allocation8 + $0x1f0] sm:$0xff] %vm770, %v768
    %834 = vst.msk [vmem:[#allocation8 + $0x1f8] sm:$0xff] %vm770, %v769
    // Predicated region
    $region26: #{_lambda_.1} parent=1 // pred_check
      _
    $region27: #{_lambda_.1} parent=1 // pred_check_branch
      %836 = sbr.rel (0) target = $region29
    $region28: #{_lambda_.1} parent=1 // pred_region
      %s838 = ssub.s32 8192, 8192
      %839 = vsyncadd [#allocation4], %s838
      %s840 = sshll.u32 [#allocation8], 4
      %s841 = int_to_ptr.vmem [resolvable:$true] %s840
      %846 = dma.vmem_to_hbm [thread:$0]  %s841, 8192, %s3, [#allocation4], 128, 128, 8
    $region29: #{_lambda_.1} parent=1 // pred_fallthru
      _
    // Predicated region
    $region30: #{_lambda_.1} parent=1 // pred_check
      _
    $region31: #{_lambda_.1} parent=1 // pred_check_branch
      %848 = sbr.rel (0) target = $region33
    $region32: #{_lambda_.1} parent=1 // pred_region
      %849 = dma.done [#allocation4], 8192
    $region33: #{_lambda_.1} parent=1 // pred_fallthru
      _
    %850 = vsyncpa [#allocation3], 1
    %851 = vsyncpa [#allocation6], 1
    %852 = vsyncpa [#allocation4], 1

</llo_original>
